<compile_context>
chip_gen: v5e
topology: v5e:2x2
jax: 0.10.0
libtpu: 0.0.40
codegen_flags: <defaults>
</compile_context>

<pallas_src>
import jax
import jax.numpy as jnp
from jax.experimental import pallas as pl
from jax.experimental.pallas import tpu as pltpu


def _round_up(x, m):
    return (x + m - 1) // m * m


def _largest_tile(dim, cap):
    """Largest multiple of 128 that divides `dim` (itself a multiple of 128), <= cap."""
    t = min(dim, _round_up(cap, 128))
    while dim % t:
        t -= 128
    return t


# ----------------------------------------------------------------------------
# Kernels
# ----------------------------------------------------------------------------
def _make_mean_kernel(x_resident):
    """Kernel for pre-reduced (member-mean) weights.  Grid = (b, n, d)."""

    def kernel(x_ref, w_ref, bmean_ref, o_ref):
        d = pl.program_id(2)
        n_d = pl.num_programs(2)

        # x is either fully resident (indexed by feature chunk d on its leading
        # axis) or a per-(b, d) tile.
        x_tile = x_ref[d] if x_resident else x_ref[...]
        partial = jnp.dot(x_tile, w_ref[...], preferred_element_type=jnp.float32)

        @pl.when(d == 0)
        def _():
            o_ref[...] = jnp.zeros_like(o_ref)

        @pl.when(d != n_d - 1)
        def _():
            o_ref[...] += partial

        @pl.when(d == n_d - 1)
        def _():
            # Fused last-accumulate + finalize: single read-modify-write.
            # (Bias mean was precomputed in the wrapper.)
            o_ref[...] = o_ref[...] + partial + bmean_ref[...]

    return kernel


def _make_stream_kernel(n_members, x_resident):
    """Kernel streaming raw member weights (no padding case, M >= 2).

    Grid = (b, n, d, m).  Member weight tiles are summed on the VPU; one MXU
    matmul per (b, n, d) tile is issued on the last member step, with the
    final member tile added in vregs (no extra wsum store/load).
    """
    inv_m = 1.0 / n_members

    def kernel(x_ref, w_ref, bmean_ref, o_ref, wsum_ref):
        d = pl.program_id(2)
        m = pl.program_id(3)
        n_d = pl.num_programs(2)

        @pl.when(jnp.logical_and(d == 0, m == 0))
        def _():
            o_ref[...] = jnp.zeros_like(o_ref)

        @pl.when(m == 0)
        def _():
            wsum_ref[...] = w_ref[0]

        @pl.when(jnp.logical_and(m != 0, m != n_members - 1))
        def _():
            wsum_ref[...] += w_ref[0]

        @pl.when(m == n_members - 1)
        def _():
            x_tile = x_ref[d] if x_resident else x_ref[...]
            wfinal = wsum_ref[...] + w_ref[0]          # finish sum in vregs
            partial = jnp.dot(x_tile, wfinal, preferred_element_type=jnp.float32)

            @pl.when(d != n_d - 1)
            def _():
                o_ref[...] += partial

            @pl.when(d == n_d - 1)
            def _():
                # Fused finalize: scale by 1/M and add the mean bias once.
                o_ref[...] = (o_ref[...] + partial) * inv_m + bmean_ref[...]

    return kernel


# ----------------------------------------------------------------------------
# Wrapper
# ----------------------------------------------------------------------------
def ensemble_forward(x_nchw, weights, biases):
    """Soft-voting ensemble of linear classifiers.

    x_nchw  : (B, C, H, W) float32
    weights : (M, D, K)    float32, D = C*H*W  (already transposed: x @ W_m)
    biases  : (M, 1, K)    float32
    returns : (B, K)       float32  -- mean over the M member outputs
    """
    B = x_nchw.shape[0]
    M, D, K = weights.shape
    x_flat = x_nchw.reshape(B, D)          # flatten NCHW -> (B, D), row-major

    # ---- padding / tile selection -------------------------------------------
    K_pad = _round_up(K, 128)
    D_pad = _round_up(D, 128)

    if B <= 256:
        tb = _round_up(B, 8)               # sublane-dense loads, minimal pad
        B_pad = tb
    else:
        tb = 256                           # batch tiles -> second parallel axis
        B_pad = _round_up(B, tb)
    n_b = B_pad // tb

    # Class tile: contiguous full padded class dim when small (lane-dense,
    # fully contiguous weight-tile DMA), otherwise largest divisor <= 512.
    tn = K_pad if K_pad <= 512 else _largest_tile(K_pad, 512)
    n_n = K_pad // tn

    # Feature (reduction) tile: big, to amortize per-grid-step overhead.
    tk = _largest_tile(D_pad, 2048)
    n_d = D_pad // tk

    if (B_pad != B) or (D_pad != D):
        x_flat = jnp.pad(x_flat, ((0, B_pad - B), (0, D_pad - D)))

    # Tiny bias mean precomputed once; added at finalize inside the kernel.
    bias_mean = jnp.mean(biases.reshape(M, K), axis=0).reshape(1, K)
    if K_pad != K:
        bias_mean = jnp.pad(bias_mean, ((0, 0), (0, K_pad - K)))

    # Stream raw member weights only when no padding of the big (M, D, K)
    # tensor would be required; otherwise pre-reduce to the member mean so the
    # kernel reads a single (D_pad, K_pad) slab.
    use_stream = (D_pad == D) and (K_pad == K) and (M > 1)

    # Small flattened input: keep it fully resident in VMEM (one DMA, never
    # re-fetched per class tile).  Layout (n_d, B_pad, tk): leading-axis index.
    x_resident = (n_b == 1) and (B_pad * D_pad * 4 <= (4 << 20))
    if x_resident:
        x_in = x_flat.reshape(B_pad, n_d, tk).transpose(1, 0, 2)
        x_vmem = 2 * n_d * B_pad * tk * 4
    else:
        x_in = x_flat
        x_vmem = 2 * tb * tk * 4

    # VMEM budget: double-buffered weight/x/out tiles (+ wsum scratch) + slack.
    w_vmem = 2 * tk * tn * 4
    o_vmem = 2 * tb * tn * 4
    wsum_vmem = tk * tn * 4 if use_stream else 0
    vmem_limit = max(x_vmem + w_vmem + o_vmem + wsum_vmem + (8 << 20), 32 << 20)

    flops = 2 * B_pad * D_pad * K_pad
    x_bytes = B_pad * D_pad * 4
    o_bytes = B_pad * K_pad * 4

    if use_stream:
        grid = (n_b, n_n, n_d, M)
        if x_resident:
            x_spec = pl.BlockSpec((n_d, B_pad, tk), lambda b, n, d, m: (0, 0, 0))
        else:
            x_spec = pl.BlockSpec((tb, tk), lambda b, n, d, m: (b, d))
        in_specs = [
            x_spec,
            pl.BlockSpec((1, tk, tn), lambda b, n, d, m: (m, d, n)),
            pl.BlockSpec((1, tn), lambda b, n, d, m: (0, n)),
        ]
        out_spec = pl.BlockSpec((tb, tn), lambda b, n, d, m: (b, n))
        scratch = [pltpu.VMEM((tk, tn), jnp.float32)]
        kernel = _make_stream_kernel(M, x_resident)
        semantics = ("parallel", "parallel", "arbitrary", "arbitrary")
        w_in = weights
        w_bytes = M * D_pad * K_pad * 4
    else:
        # Pre-reduce to the member-mean weights (linearity of soft voting).
        w_in = jnp.mean(weights, axis=0)
        if (D_pad != D) or (K_pad != K):
            w_in = jnp.pad(w_in, ((0, D_pad - D), (0, K_pad - K)))
        grid = (n_b, n_n, n_d)
        if x_resident:
            x_spec = pl.BlockSpec((n_d, B_pad, tk), lambda b, n, d: (0, 0, 0))
        else:
            x_spec = pl.BlockSpec((tb, tk), lambda b, n, d: (b, d))
        in_specs = [
            x_spec,
            pl.BlockSpec((tk, tn), lambda b, n, d: (d, n)),
            pl.BlockSpec((1, tn), lambda b, n, d: (0, n)),
        ]
        out_spec = pl.BlockSpec((tb, tn), lambda b, n, d: (b, n))
        scratch = []
        kernel = _make_mean_kernel(x_resident)
        semantics = ("parallel", "parallel", "arbitrary")
        w_bytes = D_pad * K_pad * 4

    out_padded = pl.pallas_call(
        kernel,
        out_shape=jax.ShapeDtypeStruct((B_pad, K_pad), jnp.float32),
        grid_spec=pltpu.PrefetchScalarGridSpec(
            num_scalar_prefetch=0,
            grid=grid,
            in_specs=in_specs,
            out_specs=out_spec,
            scratch_shapes=scratch,
        ),
        compiler_params=pltpu.CompilerParams(
            dimension_semantics=semantics,
            vmem_limit_bytes=int(vmem_limit),
        ),
        cost_estimate=pl.CostEstimate(
            flops=flops,
            transcendentals=0,
            bytes_accessed=w_bytes + x_bytes + o_bytes,
        ),
    )(x_in, w_in, bias_mean)

    return out_padded[:B, :K]


# ----------------------------------------------------------------------------
# Reference + demo
# ----------------------------------------------------------------------------
def _reference(x, weights, biases):
    B = x.shape[0]
    M, D, K = weights.shape
    x_flat = x.reshape(B, D)
    per_model = jnp.einsum("bd,mdk->mbk", x_flat, weights) + biases  # (M, B, K)
    return jnp.mean(per_model, axis=0)                               # (B, K)


if __name__ == "__main__":
    key = jax.random.PRNGKey(0)

    # Case 1: K=10 needs lane padding -> member-mean ("mean") path.
    B, C, H, W, M, K = 2, 4, 16, 16, 3, 10
    D = C * H * W
    k1, k2, k3, key = jax.random.split(key, 4)
    x = jax.random.normal(k1, (B, C, H, W), dtype=jnp.float32)
    w = jax.random.normal(k2, (M, D, K), dtype=jnp.float32) * 0.02
    b = jax.random.normal(k3, (M, 1, K), dtype=jnp.float32) * 0.1
    out = jax.block_until_ready(ensemble_forward(x, w, b))
    ref = _reference(x, w, b)
    assert out.shape == (B, K)
    assert jnp.allclose(out, ref, atol=1e-4, rtol=1e-4)

    # Case 2: 128-aligned D and K -> raw member weights streamed ("stream" path).
    B2, C2, H2, W2, M2, K2 = 4, 2, 8, 8, 3, 128
    D2 = C2 * H2 * W2
    k1, k2, k3, key = jax.random.split(key, 4)
    x2 = jax.random.normal(k1, (B2, C2, H2, W2), dtype=jnp.float32)
    w2 = jax.random.normal(k2, (M2, D2, K2), dtype=jnp.float32) * 0.02
    b2 = jax.random.normal(k3, (M2, 1, K2), dtype=jnp.float32) * 0.1
    out2 = jax.block_until_ready(ensemble_forward(x2, w2, b2))
    ref2 = _reference(x2, w2, b2)
    assert out2.shape == (B2, K2)
    assert jnp.allclose(out2, ref2, atol=1e-4, rtol=1e-4)

    print("KERNEL_OK")
</pallas_src>

<mosaic_0001>
module attributes {stable_mosaic.version = 11 : i64} {
  func.func @kernel(%arg0: i32, %arg1: i32, %arg2: i32, %arg3: memref<1x8x1024xf32, #tpu.memory_space<vmem>>, %arg4: memref<1024x128xf32, #tpu.memory_space<vmem>>, %arg5: memref<1x128xf32, #tpu.memory_space<vmem>>, %arg6: memref<8x128xf32, #tpu.memory_space<vmem>>) attributes {dimension_semantics = [#tpu.dimension_semantics<parallel>, #tpu.dimension_semantics<parallel>, #tpu.dimension_semantics<arbitrary>], iteration_bounds = array<i64: 1, 1, 1>, scalar_prefetch = 0 : i64, scratch_operands = 0 : i64, tpu.core_type = #tpu.core_type<tc>, window_params = [{pipeline_mode = #tpu.pipeline_mode<synchronous>, transform_indices = @transform_0, window_bounds = array<i64: 1, 8, 1024>}, {transform_indices = @transform_1, window_bounds = array<i64: 1024, 128>}, {transform_indices = @transform_2, window_bounds = array<i64: 1, 128>}, {transform_indices = @transform_3, window_bounds = array<i64: 8, 128>}]} {
    %0 = arith.index_cast %arg2 : i32 to index
    %c0 = arith.constant 0 : index
    %c0_0 = arith.constant 0 : index
    %1 = vector.load %arg3[%0, %c0, %c0_0] : memref<1x8x1024xf32, #tpu.memory_space<vmem>>, vector<1x8x1024xf32>
    %2 = vector.shape_cast %1 : vector<1x8x1024xf32> to vector<8x1024xf32>
    %c0_1 = arith.constant 0 : index
    %c0_2 = arith.constant 0 : index
    %3 = vector.load %arg4[%c0_1, %c0_2] : memref<1024x128xf32, #tpu.memory_space<vmem>>, vector<1024x128xf32>
    %cst = arith.constant dense<0.000000e+00> : vector<8x128xf32>
    %4 = tpu.matmul %2, %3, %cst {dimension_numbers = #tpu.dot_dimension_numbers<[1], [0], [0], [1], [0, 0, 1, 1], [], []>} : vector<8x1024xf32>, vector<1024x128xf32>, vector<8x128xf32> -> vector<8x128xf32>
    %c0_i32 = arith.constant 0 : i32
    %5 = arith.cmpi eq, %arg2, %c0_i32 : i32
    %6 = arith.extui %5 : i1 to i32
    %c0_i32_3 = arith.constant 0 : i32
    %7 = arith.cmpi ne, %6, %c0_i32_3 : i32
    scf.if %7 {
      %cst_8 = arith.constant 0.000000e+00 : f32
      %14 = vector.broadcast %cst_8 : f32 to vector<8x128xf32>
      %c0_9 = arith.constant 0 : index
      %c0_10 = arith.constant 0 : index
      %15 = vector.load %arg6[%c0_9, %c0_10] : memref<8x128xf32, #tpu.memory_space<vmem>>, vector<8x128xf32>
      tpu.vector_store %arg6[%c0_9, %c0_10], %14 {strides = array<i32>} : memref<8x128xf32, #tpu.memory_space<vmem>>, vector<8x128xf32>,
    } else {
    }
    %c0_i32_4 = arith.constant 0 : i32
    %8 = arith.cmpi ne, %arg2, %c0_i32_4 : i32
    %9 = arith.extui %8 : i1 to i32
    %c0_i32_5 = arith.constant 0 : i32
    %10 = arith.cmpi ne, %9, %c0_i32_5 : i32
    scf.if %10 {
      %c0_8 = arith.constant 0 : index
      %c0_9 = arith.constant 0 : index
      %14 = vector.load %arg6[%c0_8, %c0_9] : memref<8x128xf32, #tpu.memory_space<vmem>>, vector<8x128xf32>
      %15 = arith.addf %14, %4 : vector<8x128xf32>
      %c0_10 = arith.constant 0 : index
      %c0_11 = arith.constant 0 : index
      %16 = vector.load %arg6[%c0_10, %c0_11] : memref<8x128xf32, #tpu.memory_space<vmem>>, vector<8x128xf32>
      tpu.vector_store %arg6[%c0_10, %c0_11], %15 {strides = array<i32>} : memref<8x128xf32, #tpu.memory_space<vmem>>, vector<8x128xf32>,
    } else {
    }
    %c0_i32_6 = arith.constant 0 : i32
    %11 = arith.cmpi eq, %arg2, %c0_i32_6 : i32
    %12 = arith.extui %11 : i1 to i32
    %c0_i32_7 = arith.constant 0 : i32
    %13 = arith.cmpi ne, %12, %c0_i32_7 : i32
    scf.if %13 {
      %c0_8 = arith.constant 0 : index
      %c0_9 = arith.constant 0 : index
      %14 = vector.load %arg6[%c0_8, %c0_9] : memref<8x128xf32, #tpu.memory_space<vmem>>, vector<8x128xf32>
      %15 = arith.addf %14, %4 : vector<8x128xf32>
      %c0_10 = arith.constant 0 : index
      %c0_11 = arith.constant 0 : index
      %16 = vector.load %arg5[%c0_10, %c0_11] : memref<1x128xf32, #tpu.memory_space<vmem>>, vector<1x128xf32>
      %17 = vector.broadcast %16 : vector<1x128xf32> to vector<8x128xf32>
      %18 = arith.addf %15, %17 : vector<8x128xf32>
      %c0_12 = arith.constant 0 : index
      %c0_13 = arith.constant 0 : index
      %19 = vector.load %arg6[%c0_12, %c0_13] : memref<8x128xf32, #tpu.memory_space<vmem>>, vector<8x128xf32>
      tpu.vector_store %arg6[%c0_12, %c0_13], %18 {strides = array<i32>} : memref<8x128xf32, #tpu.memory_space<vmem>>, vector<8x128xf32>,
    } else {
    }
    return
  }
  func.func @transform_0(%arg0: i32, %arg1: i32, %arg2: i32) -> (i32, i32, i32) {
    %c0_i32 = arith.constant 0 : i32
    %c0_i32_0 = arith.constant 0 : i32
    %c0_i32_1 = arith.constant 0 : i32
    %c0_i32_2 = arith.constant 0 : i32
    return %c0_i32, %c0_i32_0, %c0_i32_1 : i32, i32, i32
  }
  func.func @transform_1(%arg0: i32, %arg1: i32, %arg2: i32) -> (i32, i32) {
    %c0_i32 = arith.constant 0 : i32
    return %arg2, %arg1 : i32, i32
  }
  func.func @transform_2(%arg0: i32, %arg1: i32, %arg2: i32) -> (i32, i32) {
    %c0_i32 = arith.constant 0 : i32
    %c0_i32_0 = arith.constant 0 : i32
    return %c0_i32, %arg1 : i32, i32
  }
  func.func @transform_3(%arg0: i32, %arg1: i32, %arg2: i32) -> (i32, i32) {
    %c0_i32 = arith.constant 0 : i32
    return %arg0, %arg1 : i32, i32
  }
}

</mosaic_0001>

<llo_original>
// kernel: tpu_custom_call.1
$region0: #{tpu_custom_call.1}
  #allocation0 [shape = 'u32[]', space=smem, size = 0x4, offset = 0x4, fixed_abs, tag = 'smem constant byte address 0x4 - core index']
  #allocation1 [shape = 'u32[72,128]{1,0:T(1,128)}', space=vmem, size = 0x9000, scoped, tag = 'internal scratch']
  %s0 = inlined_call_operand.hbm [shape: f32[1,8,1024], index: 0, kind: input, shape index: {}]
  %s1 = inlined_call_operand.hbm [shape: f32[1024,128], index: 1, kind: input, shape index: {}]
  %s2 = inlined_call_operand.vmem [shape: f32[1,128], index: 2, kind: input, shape index: {}]
  %s3 = inlined_call_operand.hbm [shape: f32[8,128], index: 3, kind: output, shape index: {}]
  %s4 = sld [smem:[#allocation0]]
  $region42: #{tpu_custom_call.1} parent=0
    _
  %s6 = ssub.s32 1, %s4
  %s7 = scalar_select 0, %s6, %s4
  $region1: #{tpu_custom_call.1} parent=0
    #allocation2 [shape = 'u8[32768]{0}', space=vmem, size = 0x8000, scoped, tag = 'input window, operand 0, single buffered']
    #allocation3 [shape = 's32[1]{0}', space=sflag, size = 0x4, scoped, tag = 'scoped memory for tpu_custom_call.1']
    #allocation4 [shape = 's32[1]{0}', space=sflag, size = 0x4, scoped, tag = 'scoped memory for tpu_custom_call.1']
    #allocation5 [shape = 'u8[524288]{0}', space=vmem, size = 0x80000, scoped, tag = 'input window, operand 1, single buffered']
    #allocation6 [shape = 's32[1]{0}', space=sflag, size = 0x4, scoped, tag = 'scoped memory for tpu_custom_call.1']
    #allocation7 [shape = 'u8[4096]{0}', space=vmem, size = 0x1000, scoped, tag = 'output window, operand 0, single buffered']
    %8 = vsyncpa [#allocation3], 0
    %9 = vsyncpa [#allocation6], 0
    %10 = vsyncpa [#allocation4], 0
    // Predicated region
    $region2: #{tpu_custom_call.1} parent=1 // pred_check
      _
    $region3: #{tpu_custom_call.1} parent=1 // pred_check_branch
      %12 = sbr.rel (0) target = $region5
    $region4: #{tpu_custom_call.1} parent=1 // pred_region
      %14 = vsyncadd [#allocation3], 0
      %s16 = sshll.u32 %s0, 4
      %s17 = int_to_ptr.hbm [resolvable:$true] %s16
      %s18 = sshll.u32 [#allocation2], 4
      %s19 = int_to_ptr.vmem [resolvable:$true] %s18
      %21 = dma.hbm_to_vmem [thread:$0]  %s17, 1024, %s19, [#allocation3]
    $region5: #{tpu_custom_call.1} parent=1 // pred_fallthru
      _
    // Predicated region
    $region6: #{tpu_custom_call.1} parent=1 // pred_check
      _
    $region7: #{tpu_custom_call.1} parent=1 // pred_check_branch
      %23 = sbr.rel (0) target = $region9
    $region8: #{tpu_custom_call.1} parent=1 // pred_region
      %25 = vsyncadd [#allocation6], 0
      %s26 = sshll.u32 %s1, 4
      %s27 = int_to_ptr.hbm [resolvable:$true] %s26
      %s28 = sshll.u32 [#allocation5], 4
      %s29 = int_to_ptr.vmem [resolvable:$true] %s28
      %34 = dma.hbm_to_vmem [thread:$0]  %s27, 16384, %s29, [#allocation6], 128, 128, 8
    $region9: #{tpu_custom_call.1} parent=1 // pred_fallthru
      _
    // Predicated region
    $region10: #{tpu_custom_call.1} parent=1 // pred_check
      _
    $region11: #{tpu_custom_call.1} parent=1 // pred_check_branch
      %36 = sbr.rel (0) target = $region13
    $region12: #{tpu_custom_call.1} parent=1 // pred_region
      _
    $region13: #{tpu_custom_call.1} parent=1 // pred_fallthru
      _
    // Predicated region
    $region14: #{tpu_custom_call.1} parent=1 // pred_check
      _
    $region15: #{tpu_custom_call.1} parent=1 // pred_check_branch
      %38 = sbr.rel (0) target = $region17
    $region16: #{tpu_custom_call.1} parent=1 // pred_region
      %40 = dma.done [#allocation3], 1024
    $region17: #{tpu_custom_call.1} parent=1 // pred_fallthru
      _
    // Predicated region
    $region18: #{tpu_custom_call.1} parent=1 // pred_check
      _
    $region19: #{tpu_custom_call.1} parent=1 // pred_check_branch
      %42 = sbr.rel (0) target = $region21
    $region20: #{tpu_custom_call.1} parent=1 // pred_region
      %44 = dma.done [#allocation6], 16384
    $region21: #{tpu_custom_call.1} parent=1 // pred_fallthru
      _
    %s45 = smul.u32 0, 8
    %s46 = smul.addr %s45, 8
    %s47 = scalar_lea.vmem [#allocation2], %s46
    %v48 = vld [vmem:[%s47] sm:$0xff]
    %v49 = vld [vmem:[%s47 + $0x8] sm:$0xff]
    %v50 = vld [vmem:[%s47 + $0x10] sm:$0xff]
    %v51 = vld [vmem:[%s47 + $0x18] sm:$0xff]
    %v52 = vld [vmem:[%s47 + $0x20] sm:$0xff]
    %v53 = vld [vmem:[%s47 + $0x28] sm:$0xff]
    %v54 = vld [vmem:[%s47 + $0x30] sm:$0xff]
    %v55 = vld [vmem:[%s47 + $0x38] sm:$0xff]
    %v56 = vld [vmem:[#allocation5] sm:$0xff]
    %v57 = vld [vmem:[#allocation5 + $0x8] sm:$0xff]
    %v58 = vld [vmem:[#allocation5 + $0x10] sm:$0xff]
    %v59 = vld [vmem:[#allocation5 + $0x18] sm:$0xff]
    %v60 = vld [vmem:[#allocation5 + $0x20] sm:$0xff]
    %v61 = vld [vmem:[#allocation5 + $0x28] sm:$0xff]
    %v62 = vld [vmem:[#allocation5 + $0x30] sm:$0xff]
    %v63 = vld [vmem:[#allocation5 + $0x38] sm:$0xff]
    %v64 = vld [vmem:[#allocation5 + $0x40] sm:$0xff]
    %v65 = vld [vmem:[#allocation5 + $0x48] sm:$0xff]
    %v66 = vld [vmem:[#allocation5 + $0x50] sm:$0xff]
    %v67 = vld [vmem:[#allocation5 + $0x58] sm:$0xff]
    %v68 = vld [vmem:[#allocation5 + $0x60] sm:$0xff]
    %v69 = vld [vmem:[#allocation5 + $0x68] sm:$0xff]
    %v70 = vld [vmem:[#allocation5 + $0x70] sm:$0xff]
    %v71 = vld [vmem:[#allocation5 + $0x78] sm:$0xff]
    %v72 = vld [vmem:[#allocation5 + $0x80] sm:$0xff]
    %v73 = vld [vmem:[#allocation5 + $0x88] sm:$0xff]
    %v74 = vld [vmem:[#allocation5 + $0x90] sm:$0xff]
    %v75 = vld [vmem:[#allocation5 + $0x98] sm:$0xff]
    %v76 = vld [vmem:[#allocation5 + $0xa0] sm:$0xff]
    %v77 = vld [vmem:[#allocation5 + $0xa8] sm:$0xff]
    %v78 = vld [vmem:[#allocation5 + $0xb0] sm:$0xff]
    %v79 = vld [vmem:[#allocation5 + $0xb8] sm:$0xff]
    %v80 = vld [vmem:[#allocation5 + $0xc0] sm:$0xff]
    %v81 = vld [vmem:[#allocation5 + $0xc8] sm:$0xff]
    %v82 = vld [vmem:[#allocation5 + $0xd0] sm:$0xff]
    %v83 = vld [vmem:[#allocation5 + $0xd8] sm:$0xff]
    %v84 = vld [vmem:[#allocation5 + $0xe0] sm:$0xff]
    %v85 = vld [vmem:[#allocation5 + $0xe8] sm:$0xff]
    %v86 = vld [vmem:[#allocation5 + $0xf0] sm:$0xff]
    %v87 = vld [vmem:[#allocation5 + $0xf8] sm:$0xff]
    %v88 = vld [vmem:[#allocation5 + $0x100] sm:$0xff]
    %v89 = vld [vmem:[#allocation5 + $0x108] sm:$0xff]
    %v90 = vld [vmem:[#allocation5 + $0x110] sm:$0xff]
    %v91 = vld [vmem:[#allocation5 + $0x118] sm:$0xff]
    %v92 = vld [vmem:[#allocation5 + $0x120] sm:$0xff]
    %v93 = vld [vmem:[#allocation5 + $0x128] sm:$0xff]
    %v94 = vld [vmem:[#allocation5 + $0x130] sm:$0xff]
    %v95 = vld [vmem:[#allocation5 + $0x138] sm:$0xff]
    %v96 = vld [vmem:[#allocation5 + $0x140] sm:$0xff]
    %v97 = vld [vmem:[#allocation5 + $0x148] sm:$0xff]
    %v98 = vld [vmem:[#allocation5 + $0x150] sm:$0xff]
    %v99 = vld [vmem:[#allocation5 + $0x158] sm:$0xff]
    %v100 = vld [vmem:[#allocation5 + $0x160] sm:$0xff]
    %v101 = vld [vmem:[#allocation5 + $0x168] sm:$0xff]
    %v102 = vld [vmem:[#allocation5 + $0x170] sm:$0xff]
    %v103 = vld [vmem:[#allocation5 + $0x178] sm:$0xff]
    %v104 = vld [vmem:[#allocation5 + $0x180] sm:$0xff]
    %v105 = vld [vmem:[#allocation5 + $0x188] sm:$0xff]
    %v106 = vld [vmem:[#allocation5 + $0x190] sm:$0xff]
    %v107 = vld [vmem:[#allocation5 + $0x198] sm:$0xff]
    %v108 = vld [vmem:[#allocation5 + $0x1a0] sm:$0xff]
    %v109 = vld [vmem:[#allocation5 + $0x1a8] sm:$0xff]
    %v110 = vld [vmem:[#allocation5 + $0x1b0] sm:$0xff]
    %v111 = vld [vmem:[#allocation5 + $0x1b8] sm:$0xff]
    %v112 = vld [vmem:[#allocation5 + $0x1c0] sm:$0xff]
    %v113 = vld [vmem:[#allocation5 + $0x1c8] sm:$0xff]
    %v114 = vld [vmem:[#allocation5 + $0x1d0] sm:$0xff]
    %v115 = vld [vmem:[#allocation5 + $0x1d8] sm:$0xff]
    %v116 = vld [vmem:[#allocation5 + $0x1e0] sm:$0xff]
    %v117 = vld [vmem:[#allocation5 + $0x1e8] sm:$0xff]
    %v118 = vld [vmem:[#allocation5 + $0x1f0] sm:$0xff]
    %v119 = vld [vmem:[#allocation5 + $0x1f8] sm:$0xff]
    %v120 = vld [vmem:[#allocation5 + $0x200] sm:$0xff]
    %v121 = vld [vmem:[#allocation5 + $0x208] sm:$0xff]
    %v122 = vld [vmem:[#allocation5 + $0x210] sm:$0xff]
    %v123 = vld [vmem:[#allocation5 + $0x218] sm:$0xff]
    %v124 = vld [vmem:[#allocation5 + $0x220] sm:$0xff]
    %v125 = vld [vmem:[#allocation5 + $0x228] sm:$0xff]
    %v126 = vld [vmem:[#allocation5 + $0x230] sm:$0xff]
    %v127 = vld [vmem:[#allocation5 + $0x238] sm:$0xff]
    %v128 = vld [vmem:[#allocation5 + $0x240] sm:$0xff]
    %v129 = vld [vmem:[#allocation5 + $0x248] sm:$0xff]
    %v130 = vld [vmem:[#allocation5 + $0x250] sm:$0xff]
    %v131 = vld [vmem:[#allocation5 + $0x258] sm:$0xff]
    %v132 = vld [vmem:[#allocation5 + $0x260] sm:$0xff]
    %v133 = vld [vmem:[#allocation5 + $0x268] sm:$0xff]
    %v134 = vld [vmem:[#allocation5 + $0x270] sm:$0xff]
    %v135 = vld [vmem:[#allocation5 + $0x278] sm:$0xff]
    %v136 = vld [vmem:[#allocation5 + $0x280] sm:$0xff]
    %v137 = vld [vmem:[#allocation5 + $0x288] sm:$0xff]
    %v138 = vld [vmem:[#allocation5 + $0x290] sm:$0xff]
    %v139 = vld [vmem:[#allocation5 + $0x298] sm:$0xff]
    %v140 = vld [vmem:[#allocation5 + $0x2a0] sm:$0xff]
    %v141 = vld [vmem:[#allocation5 + $0x2a8] sm:$0xff]
    %v142 = vld [vmem:[#allocation5 + $0x2b0] sm:$0xff]
    %v143 = vld [vmem:[#allocation5 + $0x2b8] sm:$0xff]
    %v144 = vld [vmem:[#allocation5 + $0x2c0] sm:$0xff]
    %v145 = vld [vmem:[#allocation5 + $0x2c8] sm:$0xff]
    %v146 = vld [vmem:[#allocation5 + $0x2d0] sm:$0xff]
    %v147 = vld [vmem:[#allocation5 + $0x2d8] sm:$0xff]
    %v148 = vld [vmem:[#allocation5 + $0x2e0] sm:$0xff]
    %v149 = vld [vmem:[#allocation5 + $0x2e8] sm:$0xff]
    %v150 = vld [vmem:[#allocation5 + $0x2f0] sm:$0xff]
    %v151 = vld [vmem:[#allocation5 + $0x2f8] sm:$0xff]
    %v152 = vld [vmem:[#allocation5 + $0x300] sm:$0xff]
    %v153 = vld [vmem:[#allocation5 + $0x308] sm:$0xff]
    %v154 = vld [vmem:[#allocation5 + $0x310] sm:$0xff]
    %v155 = vld [vmem:[#allocation5 + $0x318] sm:$0xff]
    %v156 = vld [vmem:[#allocation5 + $0x320] sm:$0xff]
    %v157 = vld [vmem:[#allocation5 + $0x328] sm:$0xff]
    %v158 = vld [vmem:[#allocation5 + $0x330] sm:$0xff]
    %v159 = vld [vmem:[#allocation5 + $0x338] sm:$0xff]
    %v160 = vld [vmem:[#allocation5 + $0x340] sm:$0xff]
    %v161 = vld [vmem:[#allocation5 + $0x348] sm:$0xff]
    %v162 = vld [vmem:[#allocation5 + $0x350] sm:$0xff]
    %v163 = vld [vmem:[#allocation5 + $0x358] sm:$0xff]
    %v164 = vld [vmem:[#allocation5 + $0x360] sm:$0xff]
    %v165 = vld [vmem:[#allocation5 + $0x368] sm:$0xff]
    %v166 = vld [vmem:[#allocation5 + $0x370] sm:$0xff]
    %v167 = vld [vmem:[#allocation5 + $0x378] sm:$0xff]
    %v168 = vld [vmem:[#allocation5 + $0x380] sm:$0xff]
    %v169 = vld [vmem:[#allocation5 + $0x388] sm:$0xff]
    %v170 = vld [vmem:[#allocation5 + $0x390] sm:$0xff]
    %v171 = vld [vmem:[#allocation5 + $0x398] sm:$0xff]
    %v172 = vld [vmem:[#allocation5 + $0x3a0] sm:$0xff]
    %v173 = vld [vmem:[#allocation5 + $0x3a8] sm:$0xff]
    %v174 = vld [vmem:[#allocation5 + $0x3b0] sm:$0xff]
    %v175 = vld [vmem:[#allocation5 + $0x3b8] sm:$0xff]
    %v176 = vld [vmem:[#allocation5 + $0x3c0] sm:$0xff]
    %v177 = vld [vmem:[#allocation5 + $0x3c8] sm:$0xff]
    %v178 = vld [vmem:[#allocation5 + $0x3d0] sm:$0xff]
    %v179 = vld [vmem:[#allocation5 + $0x3d8] sm:$0xff]
    %v180 = vld [vmem:[#allocation5 + $0x3e0] sm:$0xff]
    %v181 = vld [vmem:[#allocation5 + $0x3e8] sm:$0xff]
    %v182 = vld [vmem:[#allocation5 + $0x3f0] sm:$0xff]
    %v183 = vld [vmem:[#allocation5 + $0x3f8] sm:$0xff]
    %184 = vmatpush.msra.mxu0 %v71
    %185 = vmatpush.msra.mxu0 %v70
    %186 = vmatpush.msra.mxu0 %v69
    %187 = vmatpush.msra.mxu0 %v68
    %188 = vmatpush.msra.mxu0 %v67
    %189 = vmatpush.msra.mxu0 %v66
    %190 = vmatpush.msra.mxu0 %v65
    %191 = vmatpush.msra.mxu0 %v64
    %192 = vmatpush.msra.mxu0 %v63
    %193 = vmatpush.msra.mxu0 %v62
    %194 = vmatpush.msra.mxu0 %v61
    %195 = vmatpush.msra.mxu0 %v60
    %196 = vmatpush.msra.mxu0 %v59
    %197 = vmatpush.msra.mxu0 %v58
    %198 = vmatpush.msra.mxu0 %v57
    %199 = vmatpush.msra.mxu0 %v56
    %200 = vmatmul.f32.gmra.mxu0 %v48
    %v201 = vpop.f32.mrf.mxu0
    %v202 = vadd.f32 0.0, %v201
    %203 = vdwg.mxu0
    %204 = vmatpush.msra.mxu0 %v87
    %205 = vmatpush.msra.mxu0 %v86
    %206 = vmatpush.msra.mxu0 %v85
    %207 = vmatpush.msra.mxu0 %v84
    %208 = vmatpush.msra.mxu0 %v83
    %209 = vmatpush.msra.mxu0 %v82
    %210 = vmatpush.msra.mxu0 %v81
    %211 = vmatpush.msra.mxu0 %v80
    %212 = vmatpush.msra.mxu0 %v79
    %213 = vmatpush.msra.mxu0 %v78
    %214 = vmatpush.msra.mxu0 %v77
    %215 = vmatpush.msra.mxu0 %v76
    %216 = vmatpush.msra.mxu0 %v75
    %217 = vmatpush.msra.mxu0 %v74
    %218 = vmatpush.msra.mxu0 %v73
    %219 = vmatpush.msra.mxu0 %v72
    %220 = vmatmul.f32.gmra.mxu0 %v49
    %v221 = vpop.f32.mrf.mxu0
    %v222 = vadd.f32 %v202, %v221
    %223 = vdwg.mxu0
    %224 = vmatpush.msra.mxu0 %v103
    %225 = vmatpush.msra.mxu0 %v102
    %226 = vmatpush.msra.mxu0 %v101
    %227 = vmatpush.msra.mxu0 %v100
    %228 = vmatpush.msra.mxu0 %v99
    %229 = vmatpush.msra.mxu0 %v98
    %230 = vmatpush.msra.mxu0 %v97
    %231 = vmatpush.msra.mxu0 %v96
    %232 = vmatpush.msra.mxu0 %v95
    %233 = vmatpush.msra.mxu0 %v94
    %234 = vmatpush.msra.mxu0 %v93
    %235 = vmatpush.msra.mxu0 %v92
    %236 = vmatpush.msra.mxu0 %v91
    %237 = vmatpush.msra.mxu0 %v90
    %238 = vmatpush.msra.mxu0 %v89
    %239 = vmatpush.msra.mxu0 %v88
    %240 = vmatmul.f32.gmra.mxu0 %v50
    %v241 = vpop.f32.mrf.mxu0
    %v242 = vadd.f32 %v222, %v241
    %243 = vdwg.mxu0
    %244 = vmatpush.msra.mxu0 %v119
    %245 = vmatpush.msra.mxu0 %v118
    %246 = vmatpush.msra.mxu0 %v117
    %247 = vmatpush.msra.mxu0 %v116
    %248 = vmatpush.msra.mxu0 %v115
    %249 = vmatpush.msra.mxu0 %v114
    %250 = vmatpush.msra.mxu0 %v113
    %251 = vmatpush.msra.mxu0 %v112
    %252 = vmatpush.msra.mxu0 %v111
    %253 = vmatpush.msra.mxu0 %v110
    %254 = vmatpush.msra.mxu0 %v109
    %255 = vmatpush.msra.mxu0 %v108
    %256 = vmatpush.msra.mxu0 %v107
    %257 = vmatpush.msra.mxu0 %v106
    %258 = vmatpush.msra.mxu0 %v105
    %259 = vmatpush.msra.mxu0 %v104
    %260 = vmatmul.f32.gmra.mxu0 %v51
    %v261 = vpop.f32.mrf.mxu0
    %v262 = vadd.f32 %v242, %v261
    %263 = vdwg.mxu0
    %264 = vmatpush.msra.mxu0 %v135
    %265 = vmatpush.msra.mxu0 %v134
    %266 = vmatpush.msra.mxu0 %v133
    %267 = vmatpush.msra.mxu0 %v132
    %268 = vmatpush.msra.mxu0 %v131
    %269 = vmatpush.msra.mxu0 %v130
    %270 = vmatpush.msra.mxu0 %v129
    %271 = vmatpush.msra.mxu0 %v128
    %272 = vmatpush.msra.mxu0 %v127
    %273 = vmatpush.msra.mxu0 %v126
    %274 = vmatpush.msra.mxu0 %v125
    %275 = vmatpush.msra.mxu0 %v124
    %276 = vmatpush.msra.mxu0 %v123
    %277 = vmatpush.msra.mxu0 %v122
    %278 = vmatpush.msra.mxu0 %v121
    %279 = vmatpush.msra.mxu0 %v120
    %280 = vmatmul.f32.gmra.mxu0 %v52
    %v281 = vpop.f32.mrf.mxu0
    %v282 = vadd.f32 %v262, %v281
    %283 = vdwg.mxu0
    %284 = vmatpush.msra.mxu0 %v151
    %285 = vmatpush.msra.mxu0 %v150
    %286 = vmatpush.msra.mxu0 %v149
    %287 = vmatpush.msra.mxu0 %v148
    %288 = vmatpush.msra.mxu0 %v147
    %289 = vmatpush.msra.mxu0 %v146
    %290 = vmatpush.msra.mxu0 %v145
    %291 = vmatpush.msra.mxu0 %v144
    %292 = vmatpush.msra.mxu0 %v143
    %293 = vmatpush.msra.mxu0 %v142
    %294 = vmatpush.msra.mxu0 %v141
    %295 = vmatpush.msra.mxu0 %v140
    %296 = vmatpush.msra.mxu0 %v139
    %297 = vmatpush.msra.mxu0 %v138
    %298 = vmatpush.msra.mxu0 %v137
    %299 = vmatpush.msra.mxu0 %v136
    %300 = vmatmul.f32.gmra.mxu0 %v53
    %v301 = vpop.f32.mrf.mxu0
    %v302 = vadd.f32 %v282, %v301
    %303 = vdwg.mxu0
    %304 = vmatpush.msra.mxu0 %v167
    %305 = vmatpush.msra.mxu0 %v166
    %306 = vmatpush.msra.mxu0 %v165
    %307 = vmatpush.msra.mxu0 %v164
    %308 = vmatpush.msra.mxu0 %v163
    %309 = vmatpush.msra.mxu0 %v162
    %310 = vmatpush.msra.mxu0 %v161
    %311 = vmatpush.msra.mxu0 %v160
    %312 = vmatpush.msra.mxu0 %v159
    %313 = vmatpush.msra.mxu0 %v158
    %314 = vmatpush.msra.mxu0 %v157
    %315 = vmatpush.msra.mxu0 %v156
    %316 = vmatpush.msra.mxu0 %v155
    %317 = vmatpush.msra.mxu0 %v154
    %318 = vmatpush.msra.mxu0 %v153
    %319 = vmatpush.msra.mxu0 %v152
    %320 = vmatmul.f32.gmra.mxu0 %v54
    %v321 = vpop.f32.mrf.mxu0
    %v322 = vadd.f32 %v302, %v321
    %323 = vdwg.mxu0
    %324 = vmatpush.msra.mxu0 %v183
    %325 = vmatpush.msra.mxu0 %v182
    %326 = vmatpush.msra.mxu0 %v181
    %327 = vmatpush.msra.mxu0 %v180
    %328 = vmatpush.msra.mxu0 %v179
    %329 = vmatpush.msra.mxu0 %v178
    %330 = vmatpush.msra.mxu0 %v177
    %331 = vmatpush.msra.mxu0 %v176
    %332 = vmatpush.msra.mxu0 %v175
    %333 = vmatpush.msra.mxu0 %v174
    %334 = vmatpush.msra.mxu0 %v173
    %335 = vmatpush.msra.mxu0 %v172
    %336 = vmatpush.msra.mxu0 %v171
    %337 = vmatpush.msra.mxu0 %v170
    %338 = vmatpush.msra.mxu0 %v169
    %339 = vmatpush.msra.mxu0 %v168
    %340 = vmatmul.f32.gmra.mxu0 %v55
    %v341 = vpop.f32.mrf.mxu0
    %v342 = vadd.f32 %v322, %v341
    %343 = vdwg.mxu0
    %p344 = scmp.eq.s32.totalorder 0, 0
    // Predicated region
    $region22: #{tpu_custom_call.1} parent=1 // pred_check
      %p345 = pneg %p344
    $region23: #{tpu_custom_call.1} parent=1 // pred_check_branch
      %347 = sbr.rel (%p345) target = $region25
    $region24: #{tpu_custom_call.1} parent=1 // pred_region
      %348 = vst [vmem:[#allocation7] sm:$0xff] 0.0
    $region25: #{tpu_custom_call.1} parent=1 // pred_fallthru
      _
    %p349 = scmp.ne.s32.totalorder 0, 0
    // Predicated region
    $region26: #{tpu_custom_call.1} parent=1 // pred_check
      %p350 = pneg %p349
    $region27: #{tpu_custom_call.1} parent=1 // pred_check_branch
      %352 = sbr.rel (%p350) target = $region29
    $region28: #{tpu_custom_call.1} parent=1 // pred_region
      %v353 = vld [vmem:[#allocation7] sm:$0xff]
      %v354 = vadd.f32 %v353, %v342
      %355 = vst [vmem:[#allocation7] sm:$0xff] %v354
    $region29: #{tpu_custom_call.1} parent=1 // pred_fallthru
      _
    // Predicated region
    $region30: #{tpu_custom_call.1} parent=1 // pred_check
      %p356 = pneg %p344
    $region31: #{tpu_custom_call.1} parent=1 // pred_check_branch
      %358 = sbr.rel (%p356) target = $region33
    $region32: #{tpu_custom_call.1} parent=1 // pred_region
      %v359 = vld [vmem:[#allocation7] sm:$0xff]
      %v360 = vadd.f32 %v359, %v342
      %v361 = vld [vmem:[%s2] sm:$0x1]
      %v363 = vperm.slane %v361, 0
      %v365 = vadd.f32 %v360, %v363
      %366 = vst [vmem:[#allocation7] sm:$0xff] %v365
    $region33: #{tpu_custom_call.1} parent=1 // pred_fallthru
      _
    // Predicated region
    $region34: #{tpu_custom_call.1} parent=1 // pred_check
      _
    $region35: #{tpu_custom_call.1} parent=1 // pred_check_branch
      %368 = sbr.rel (0) target = $region37
    $region36: #{tpu_custom_call.1} parent=1 // pred_region
      %370 = vsyncadd [#allocation4], 0
      %s372 = sshll.u32 [#allocation7], 4
      %s373 = int_to_ptr.vmem [resolvable:$true] %s372
      %s374 = sshll.u32 %s3, 4
      %s375 = int_to_ptr.hbm [resolvable:$true] %s374
      %377 = dma.vmem_to_hbm [thread:$0]  %s373, 128, %s375, [#allocation4]
    $region37: #{tpu_custom_call.1} parent=1 // pred_fallthru
      _
    // Predicated region
    $region38: #{tpu_custom_call.1} parent=1 // pred_check
      _
    $region39: #{tpu_custom_call.1} parent=1 // pred_check_branch
      %379 = sbr.rel (0) target = $region41
    $region40: #{tpu_custom_call.1} parent=1 // pred_region
      %381 = dma.done [#allocation4], 128
    $region41: #{tpu_custom_call.1} parent=1 // pred_fallthru
      _
    %382 = vsyncpa [#allocation3], 1
    %383 = vsyncpa [#allocation6], 1
    %384 = vsyncpa [#allocation4], 1

</llo_original>
